<compile_context>
chip_gen: v7x
topology: tpu7x:2x2x1
jax: 0.10.0
libtpu: 0.0.40
codegen_flags: <defaults>
</compile_context>

<pallas_src>
import functools

import jax
import jax.numpy as jnp
from jax.experimental import pallas as pl
from jax.experimental.pallas import tpu as pltpu


HIDDEN = 64
N_OUT = 2
LANE = 128


def _round_up(x, m):
    return ((x + m - 1) // m) * m


def _mlp_kernel(x_ref, w1t_ref, b1t_ref, wht_ref, bht_ref, w6t_ref, b6t_ref,
                out_ref, *, mm_dtype):
    """6-layer MLP forward for one transposed batch tile.

    Layout: activations are (features, batch) so the batch sits on lanes
    (full 128-wide vregs); features (64) sit on sublanes.
    """
    x = x_ref[...]                                     # (3, tm)  f32
    w1t = w1t_ref[...]                                 # (64, 3)  f32

    # ---- layer 1: K=3 contraction on the VPU as three broadcast FMAs ----
    h = (w1t[:, 0:1] * x[0:1, :]
         + w1t[:, 1:2] * x[1:2, :]
         + w1t[:, 2:3] * x[2:3, :]
         + b1t_ref[...])                               # (64, tm) f32
    h = jnp.tanh(h)

    # ---- layers 2..5: WiT (64,64) @ h (64,tm) on the MXU, f32 accumulate ----
    for i in range(4):                                 # static, unrolled
        hm = h.astype(mm_dtype)                        # no-op when mm_dtype=f32
        y = jnp.dot(wht_ref[i], hm, preferred_element_type=jnp.float32)
        h = jnp.tanh(y + bht_ref[:, i:i + 1])          # bias (64,1), f32

    # ---- layer 6: W6T (2,64) @ h (64,tm) -> (2, tm), no activation ----
    hm = h.astype(mm_dtype)
    y = jnp.dot(w6t_ref[...], hm, preferred_element_type=jnp.float32)
    out_ref[...] = (y + b6t_ref[...]).astype(out_ref.dtype)


def base_net_forward(x, params, *, tm=1024, use_bf16_matmul=True):
    """x: (N, 3) f32. params: 6 tuples (W, b) with W (in, out), b (1, out).

    Returns (u, v, w) with exact PyTorch slicing semantics: u, v are (N, 1)
    and w is the EMPTY (N, 0) slice of the (N, 2) output (as in the original
    `x[:, 2:3]` on a 2-column tensor).
    """
    n, fin = x.shape
    assert fin == 3

    (w1, b1), (w2, b2), (w3, b3), (w4, b4), (w5, b5), (w6, b6) = params
    mm_dtype = jnp.bfloat16 if use_bf16_matmul else jnp.float32

    # Pre-transpose (and, for the MXU layers, pre-cast) the weights once in
    # the wrapper so the kernel does no weight casts.
    w1t = w1.T                                                   # (64, 3) f32
    b1t = b1.T                                                   # (64, 1) f32
    wht = jnp.stack([w2.T, w3.T, w4.T, w5.T], 0).astype(mm_dtype)  # (4,64,64)
    bht = jnp.concatenate([b2, b3, b4, b5], axis=0).T            # (64, 4) f32
    w6t = w6.T.astype(mm_dtype)                                  # (2, 64)
    b6t = b6.T                                                   # (2, 1)  f32

    # Batch tile: a multiple of 128 (batch lives on lanes).  Clamp so the
    # grid has >=2 steps when the batch allows it (v7x dual TensorCores).
    tm_r = _round_up(max(tm, LANE), LANE)
    half = _round_up(max(pl.cdiv(max(n, 1), 2), 1), LANE)
    tm_eff = min(tm_r, half)
    n_pad = _round_up(max(n, 1), tm_eff)

    xt = x.T                                                     # (3, n)
    if n_pad != n:
        xt = jnp.pad(xt, ((0, 0), (0, n_pad - n)))

    grid = (n_pad // tm_eff,)
    kernel = functools.partial(_mlp_kernel, mm_dtype=mm_dtype)

    out = pl.pallas_call(
        kernel,
        out_shape=jax.ShapeDtypeStruct((N_OUT, n_pad), jnp.float32),
        grid_spec=pltpu.PrefetchScalarGridSpec(
            num_scalar_prefetch=0,
            grid=grid,
            in_specs=[
                pl.BlockSpec((3, tm_eff), lambda i: (0, i)),              # x^T tile
                pl.BlockSpec((HIDDEN, 3), lambda i: (0, 0)),              # W1^T
                pl.BlockSpec((HIDDEN, 1), lambda i: (0, 0)),              # b1^T
                pl.BlockSpec((4, HIDDEN, HIDDEN), lambda i: (0, 0, 0)),   # W2..5^T
                pl.BlockSpec((HIDDEN, 4), lambda i: (0, 0)),              # b2..5^T
                pl.BlockSpec((N_OUT, HIDDEN), lambda i: (0, 0)),          # W6^T
                pl.BlockSpec((N_OUT, 1), lambda i: (0, 0)),               # b6^T
            ],
            out_specs=pl.BlockSpec((N_OUT, tm_eff), lambda i: (0, i)),
        ),
        compiler_params=pltpu.CompilerParams(
            dimension_semantics=("parallel",)),
    )(xt, w1t, b1t, wht, bht, w6t, b6t)

    # Drop batch padding, return to (N, 2), replicate PyTorch slicing exactly.
    out2 = out[:, :n].T                                          # (n, 2)
    u = out2[:, 0:1]
    v = out2[:, 1:2]
    w = out2[:, 2:3]          # empty (n, 0), as in the original module
    return u, v, w


def init_params(key):
    """Deterministic init mimicking nn.Linear's U(-1/sqrt(fan_in), +1/sqrt(fan_in))."""
    dims = [(3, 64), (64, 64), (64, 64), (64, 64), (64, 64), (64, 2)]
    params = []
    for (fan_in, fan_out) in dims:
        key, kw, kb = jax.random.split(key, 3)
        bound = 1.0 / jnp.sqrt(jnp.float32(fan_in))
        w = jax.random.uniform(kw, (fan_in, fan_out), jnp.float32, -bound, bound)
        b = jax.random.uniform(kb, (1, fan_out), jnp.float32, -bound, bound)
        params.append((w, b))
    return params


if __name__ == "__main__":
    key = jax.random.PRNGKey(0)
    key, kx = jax.random.split(key)

    N = 333                      # deliberately NOT a multiple of the tile size
    x = jax.random.normal(kx, (N, 3), jnp.float32)
    params = init_params(key)

    # Pure-JAX reference.
    h = x
    for i, (W, b) in enumerate(params):
        h = h @ W + b
        if i < 5:
            h = jnp.tanh(h)
    ref_u, ref_v = h[:, 0:1], h[:, 1:2]

    # Default path: bf16 MXU operands, f32 accumulation / tanh.
    fwd_bf16 = jax.jit(functools.partial(base_net_forward, tm=1024,
                                         use_bf16_matmul=True))
    u, v, w = fwd_bf16(x, params)
    jax.block_until_ready((u, v, w))
    assert u.shape == (N, 1) and v.shape == (N, 1) and w.shape == (N, 0)
    assert jnp.allclose(u, ref_u, atol=5e-2, rtol=5e-2)
    assert jnp.allclose(v, ref_v, atol=5e-2, rtol=5e-2)

    # Exact-f32 path (recommended when differentiating the PINN twice).
    fwd_f32 = jax.jit(functools.partial(base_net_forward, tm=1024,
                                        use_bf16_matmul=False))
    u32, v32, w32 = fwd_f32(x, params)
    jax.block_until_ready((u32, v32, w32))
    assert u32.shape == (N, 1) and v32.shape == (N, 1) and w32.shape == (N, 0)
    assert jnp.allclose(u32, ref_u, atol=1e-5)
    assert jnp.allclose(v32, ref_v, atol=1e-5)

    print("KERNEL_OK")
</pallas_src>

<mosaic_0001>
module attributes {stable_mosaic.version = 11 : i64} {
  func.func @_mlp_kernel(%arg0: i32, %arg1: memref<3x256xf32, #tpu.memory_space<vmem>>, %arg2: memref<64x3xf32, #tpu.memory_space<vmem>>, %arg3: memref<64x1xf32, #tpu.memory_space<vmem>>, %arg4: memref<4x64x64xbf16, #tpu.memory_space<vmem>>, %arg5: memref<64x4xf32, #tpu.memory_space<vmem>>, %arg6: memref<2x64xbf16, #tpu.memory_space<vmem>>, %arg7: memref<2x1xf32, #tpu.memory_space<vmem>>, %arg8: memref<2x256xf32, #tpu.memory_space<vmem>>) attributes {dimension_semantics = [#tpu.dimension_semantics<parallel>], iteration_bounds = array<i64: 2>, scalar_prefetch = 0 : i64, scratch_operands = 0 : i64, tpu.core_type = #tpu.core_type<tc>, window_params = [{transform_indices = @transform_0, window_bounds = array<i64: 3, 256>}, {pipeline_mode = #tpu.pipeline_mode<synchronous>, transform_indices = @transform_1, window_bounds = array<i64: 64, 3>}, {pipeline_mode = #tpu.pipeline_mode<synchronous>, transform_indices = @transform_2, window_bounds = array<i64: 64, 1>}, {pipeline_mode = #tpu.pipeline_mode<synchronous>, transform_indices = @transform_3, window_bounds = array<i64: 4, 64, 64>}, {pipeline_mode = #tpu.pipeline_mode<synchronous>, transform_indices = @transform_4, window_bounds = array<i64: 64, 4>}, {pipeline_mode = #tpu.pipeline_mode<synchronous>, transform_indices = @transform_5, window_bounds = array<i64: 2, 64>}, {pipeline_mode = #tpu.pipeline_mode<synchronous>, transform_indices = @transform_6, window_bounds = array<i64: 2, 1>}, {transform_indices = @transform_7, window_bounds = array<i64: 2, 256>}]} {
    %c0 = arith.constant 0 : index
    %c0_0 = arith.constant 0 : index
    %0 = vector.load %arg1[%c0, %c0_0] : memref<3x256xf32, #tpu.memory_space<vmem>>, vector<3x256xf32>
    %c0_1 = arith.constant 0 : index
    %c0_2 = arith.constant 0 : index
    %1 = vector.load %arg2[%c0_1, %c0_2] : memref<64x3xf32, #tpu.memory_space<vmem>>, vector<64x3xf32>
    %2 = vector.extract_strided_slice %1 {offsets = [0, 0], sizes = [64, 1], strides = [1, 1]} : vector<64x3xf32> to vector<64x1xf32>
    %3 = vector.extract_strided_slice %0 {offsets = [0, 0], sizes = [1, 256], strides = [1, 1]} : vector<3x256xf32> to vector<1x256xf32>
    %4 = vector.broadcast %2 : vector<64x1xf32> to vector<64x256xf32>
    %5 = vector.broadcast %3 : vector<1x256xf32> to vector<64x256xf32>
    %6 = arith.mulf %4, %5 : vector<64x256xf32>
    %7 = vector.extract_strided_slice %1 {offsets = [0, 1], sizes = [64, 1], strides = [1, 1]} : vector<64x3xf32> to vector<64x1xf32>
    %8 = vector.extract_strided_slice %0 {offsets = [1, 0], sizes = [1, 256], strides = [1, 1]} : vector<3x256xf32> to vector<1x256xf32>
    %9 = vector.broadcast %7 : vector<64x1xf32> to vector<64x256xf32>
    %10 = vector.broadcast %8 : vector<1x256xf32> to vector<64x256xf32>
    %11 = arith.mulf %9, %10 : vector<64x256xf32>
    %12 = arith.addf %6, %11 : vector<64x256xf32>
    %13 = vector.extract_strided_slice %1 {offsets = [0, 2], sizes = [64, 1], strides = [1, 1]} : vector<64x3xf32> to vector<64x1xf32>
    %14 = vector.extract_strided_slice %0 {offsets = [2, 0], sizes = [1, 256], strides = [1, 1]} : vector<3x256xf32> to vector<1x256xf32>
    %15 = vector.broadcast %13 : vector<64x1xf32> to vector<64x256xf32>
    %16 = vector.broadcast %14 : vector<1x256xf32> to vector<64x256xf32>
    %17 = arith.mulf %15, %16 : vector<64x256xf32>
    %18 = arith.addf %12, %17 : vector<64x256xf32>
    %c0_3 = arith.constant 0 : index
    %c0_4 = arith.constant 0 : index
    %19 = vector.load %arg3[%c0_3, %c0_4] : memref<64x1xf32, #tpu.memory_space<vmem>>, vector<64x1xf32>
    %20 = vector.broadcast %19 : vector<64x1xf32> to vector<64x256xf32>
    %21 = arith.addf %18, %20 : vector<64x256xf32>
    %22 = math.tanh %21 : vector<64x256xf32>
    %23 = arith.truncf %22 : vector<64x256xf32> to vector<64x256xbf16>
    %c0_5 = arith.constant 0 : index
    %c0_6 = arith.constant 0 : index
    %c0_7 = arith.constant 0 : index
    %24 = vector.load %arg4[%c0_5, %c0_6, %c0_7] : memref<4x64x64xbf16, #tpu.memory_space<vmem>>, vector<1x64x64xbf16>
    %25 = vector.shape_cast %24 : vector<1x64x64xbf16> to vector<64x64xbf16>
    %cst = arith.constant dense<0.000000e+00> : vector<64x256xf32>
    %26 = tpu.matmul %25, %23, %cst {dimension_numbers = #tpu.dot_dimension_numbers<[1], [0], [0], [1], [0, 0, 1, 1], [], []>} : vector<64x64xbf16>, vector<64x256xbf16>, vector<64x256xf32> -> vector<64x256xf32>
    %c0_8 = arith.constant 0 : index
    %c0_9 = arith.constant 0 : index
    %27 = vector.load %arg5[%c0_8, %c0_9] : memref<64x4xf32, #tpu.memory_space<vmem>>, vector<64x1xf32>
    %28 = vector.broadcast %27 : vector<64x1xf32> to vector<64x256xf32>
    %29 = arith.addf %26, %28 : vector<64x256xf32>
    %30 = math.tanh %29 : vector<64x256xf32>
    %31 = arith.truncf %30 : vector<64x256xf32> to vector<64x256xbf16>
    %c1 = arith.constant 1 : index
    %c0_10 = arith.constant 0 : index
    %c0_11 = arith.constant 0 : index
    %32 = vector.load %arg4[%c1, %c0_10, %c0_11] : memref<4x64x64xbf16, #tpu.memory_space<vmem>>, vector<1x64x64xbf16>
    %33 = vector.shape_cast %32 : vector<1x64x64xbf16> to vector<64x64xbf16>
    %cst_12 = arith.constant dense<0.000000e+00> : vector<64x256xf32>
    %34 = tpu.matmul %33, %31, %cst_12 {dimension_numbers = #tpu.dot_dimension_numbers<[1], [0], [0], [1], [0, 0, 1, 1], [], []>} : vector<64x64xbf16>, vector<64x256xbf16>, vector<64x256xf32> -> vector<64x256xf32>
    %c0_13 = arith.constant 0 : index
    %c1_14 = arith.constant 1 : index
    %35 = vector.load %arg5[%c0_13, %c1_14] : memref<64x4xf32, #tpu.memory_space<vmem>>, vector<64x1xf32>
    %36 = vector.broadcast %35 : vector<64x1xf32> to vector<64x256xf32>
    %37 = arith.addf %34, %36 : vector<64x256xf32>
    %38 = math.tanh %37 : vector<64x256xf32>
    %39 = arith.truncf %38 : vector<64x256xf32> to vector<64x256xbf16>
    %c2 = arith.constant 2 : index
    %c0_15 = arith.constant 0 : index
    %c0_16 = arith.constant 0 : index
    %40 = vector.load %arg4[%c2, %c0_15, %c0_16] : memref<4x64x64xbf16, #tpu.memory_space<vmem>>, vector<1x64x64xbf16>
    %41 = vector.shape_cast %40 : vector<1x64x64xbf16> to vector<64x64xbf16>
    %cst_17 = arith.constant dense<0.000000e+00> : vector<64x256xf32>
    %42 = tpu.matmul %41, %39, %cst_17 {dimension_numbers = #tpu.dot_dimension_numbers<[1], [0], [0], [1], [0, 0, 1, 1], [], []>} : vector<64x64xbf16>, vector<64x256xbf16>, vector<64x256xf32> -> vector<64x256xf32>
    %c0_18 = arith.constant 0 : index
    %c2_19 = arith.constant 2 : index
    %43 = vector.load %arg5[%c0_18, %c2_19] : memref<64x4xf32, #tpu.memory_space<vmem>>, vector<64x1xf32>
    %44 = vector.broadcast %43 : vector<64x1xf32> to vector<64x256xf32>
    %45 = arith.addf %42, %44 : vector<64x256xf32>
    %46 = math.tanh %45 : vector<64x256xf32>
    %47 = arith.truncf %46 : vector<64x256xf32> to vector<64x256xbf16>
    %c3 = arith.constant 3 : index
    %c0_20 = arith.constant 0 : index
    %c0_21 = arith.constant 0 : index
    %48 = vector.load %arg4[%c3, %c0_20, %c0_21] : memref<4x64x64xbf16, #tpu.memory_space<vmem>>, vector<1x64x64xbf16>
    %49 = vector.shape_cast %48 : vector<1x64x64xbf16> to vector<64x64xbf16>
    %cst_22 = arith.constant dense<0.000000e+00> : vector<64x256xf32>
    %50 = tpu.matmul %49, %47, %cst_22 {dimension_numbers = #tpu.dot_dimension_numbers<[1], [0], [0], [1], [0, 0, 1, 1], [], []>} : vector<64x64xbf16>, vector<64x256xbf16>, vector<64x256xf32> -> vector<64x256xf32>
    %c0_23 = arith.constant 0 : index
    %c3_24 = arith.constant 3 : index
    %51 = vector.load %arg5[%c0_23, %c3_24] : memref<64x4xf32, #tpu.memory_space<vmem>>, vector<64x1xf32>
    %52 = vector.broadcast %51 : vector<64x1xf32> to vector<64x256xf32>
    %53 = arith.addf %50, %52 : vector<64x256xf32>
    %54 = math.tanh %53 : vector<64x256xf32>
    %55 = arith.truncf %54 : vector<64x256xf32> to vector<64x256xbf16>
    %c0_25 = arith.constant 0 : index
    %c0_26 = arith.constant 0 : index
    %56 = vector.load %arg6[%c0_25, %c0_26] : memref<2x64xbf16, #tpu.memory_space<vmem>>, vector<2x64xbf16>
    %cst_27 = arith.constant dense<0.000000e+00> : vector<2x256xf32>
    %57 = tpu.matmul %56, %55, %cst_27 {dimension_numbers = #tpu.dot_dimension_numbers<[1], [0], [0], [1], [0, 0, 1, 1], [], []>} : vector<2x64xbf16>, vector<64x256xbf16>, vector<2x256xf32> -> vector<2x256xf32>
    %c0_28 = arith.constant 0 : index
    %c0_29 = arith.constant 0 : index
    %58 = vector.load %arg7[%c0_28, %c0_29] : memref<2x1xf32, #tpu.memory_space<vmem>>, vector<2x1xf32>
    %59 = vector.broadcast %58 : vector<2x1xf32> to vector<2x256xf32>
    %60 = arith.addf %57, %59 : vector<2x256xf32>
    %c0_30 = arith.constant 0 : index
    %c0_31 = arith.constant 0 : index
    %61 = vector.load %arg8[%c0_30, %c0_31] : memref<2x256xf32, #tpu.memory_space<vmem>>, vector<2x256xf32>
    tpu.vector_store %arg8[%c0_30, %c0_31], %60 {strides = array<i32>} : memref<2x256xf32, #tpu.memory_space<vmem>>, vector<2x256xf32>,
    return
  }
  func.func @transform_0(%arg0: i32) -> (i32, i32) {
    %c0_i32 = arith.constant 0 : i32
    %c0_i32_0 = arith.constant 0 : i32
    return %c0_i32, %arg0 : i32, i32
  }
  func.func @transform_1(%arg0: i32) -> (i32, i32) {
    %c0_i32 = arith.constant 0 : i32
    %c0_i32_0 = arith.constant 0 : i32
    %c0_i32_1 = arith.constant 0 : i32
    return %c0_i32, %c0_i32_0 : i32, i32
  }
  func.func @transform_2(%arg0: i32) -> (i32, i32) {
    %c0_i32 = arith.constant 0 : i32
    %c0_i32_0 = arith.constant 0 : i32
    %c0_i32_1 = arith.constant 0 : i32
    return %c0_i32, %c0_i32_0 : i32, i32
  }
  func.func @transform_3(%arg0: i32) -> (i32, i32, i32) {
    %c0_i32 = arith.constant 0 : i32
    %c0_i32_0 = arith.constant 0 : i32
    %c0_i32_1 = arith.constant 0 : i32
    %c0_i32_2 = arith.constant 0 : i32
    return %c0_i32, %c0_i32_0, %c0_i32_1 : i32, i32, i32
  }
  func.func @transform_4(%arg0: i32) -> (i32, i32) {
    %c0_i32 = arith.constant 0 : i32
    %c0_i32_0 = arith.constant 0 : i32
    %c0_i32_1 = arith.constant 0 : i32
    return %c0_i32, %c0_i32_0 : i32, i32
  }
  func.func @transform_5(%arg0: i32) -> (i32, i32) {
    %c0_i32 = arith.constant 0 : i32
    %c0_i32_0 = arith.constant 0 : i32
    %c0_i32_1 = arith.constant 0 : i32
    return %c0_i32, %c0_i32_0 : i32, i32
  }
  func.func @transform_6(%arg0: i32) -> (i32, i32) {
    %c0_i32 = arith.constant 0 : i32
    %c0_i32_0 = arith.constant 0 : i32
    %c0_i32_1 = arith.constant 0 : i32
    return %c0_i32, %c0_i32_0 : i32, i32
  }
  func.func @transform_7(%arg0: i32) -> (i32, i32) {
    %c0_i32 = arith.constant 0 : i32
    %c0_i32_0 = arith.constant 0 : i32
    return %c0_i32, %arg0 : i32, i32
  }
}

</mosaic_0001>

<llo_original>
// kernel: base_net_forward.1
$region0: #{base_net_forward.1}
  #allocation0 [shape = 'u32[]', space=smem, size = 0x4, offset = 0x4, fixed_abs, tag = 'smem constant byte address 0x4 - core index']
  #allocation1 [shape = 'u32[144,128]{1,0:T(1,128)}', space=vmem, size = 0x12000, scoped, tag = 'internal scratch']
  %s0 = inlined_call_operand.vmem [shape: f32[3,512], index: 0, kind: input, shape index: {}]
  %s1 = inlined_call_operand.vmem [shape: f32[64,3], index: 1, kind: input, shape index: {}]
  %s2 = inlined_call_operand.vmem [shape: f32[64,1], index: 2, kind: input, shape index: {}]
  %s3 = inlined_call_operand.vmem [shape: bf16[4,64,64], index: 3, kind: input, shape index: {}]
  %s4 = inlined_call_operand.vmem [shape: f32[64,4], index: 4, kind: input, shape index: {}]
  %s5 = inlined_call_operand.vmem [shape: bf16[2,64], index: 5, kind: input, shape index: {}]
  %s6 = inlined_call_operand.vmem [shape: f32[2,1], index: 6, kind: input, shape index: {}]
  %s7 = inlined_call_operand.vmem [shape: f32[2,512], index: 7, kind: output, shape index: {}]
  %s8 = sld [smem:[#allocation0]]
  $region61: #{base_net_forward.1} parent=0
    _
  %s10 = ssub.s32 1, %s8
  %s11 = scalar_select 0, %s10, %s8
  loop: start=0, step=1, limit=4
  $region2: #{base_net_forward.1} parent=0 // loop_pre_header
    _
  $region3: #{base_net_forward.1} parent=0 // loop_header
    %s13 = sphi 0, %s17
    %p14 = scmp.ge.s32.totalorder %s13, 4
    %s23 = sphi 0, %s25
    %s26 = sphi 0, %s23
    %s27 = sphi 0, %s26
    %s43 = sphi 0, %s27
    %s47 = sphi 0, %s47
    %s49 = sphi 0, %s47
    %s50 = sphi 0, %s49
    %s64 = sphi 0, %s50
    %s68 = sphi 0, %s68
    %s70 = sphi 0, %s68
    %s71 = sphi 0, %s70
    %s85 = sphi 0, %s71
    %s89 = sphi 0, %s89
    %s91 = sphi 0, %s89
    %s92 = sphi 0, %s91
    %s106 = sphi 0, %s92
    %s110 = sphi 0, %s110
    %s112 = sphi 0, %s110
    %s113 = sphi 0, %s112
    %s127 = sphi 0, %s113
    %s131 = sphi 0, %s131
    %s133 = sphi 0, %s131
    %s134 = sphi 0, %s133
    %s148 = sphi 0, %s134
    %s152 = sphi 0, %s152
    %s154 = sphi 0, %s152
    %s155 = sphi 0, %s154
    %s169 = sphi 0, %s155
    %s175 = sphi 0, %s177
    %s178 = sphi 0, %s175
    %s179 = sphi 0, %s178
    %s195 = sphi 0, %s179
  $region4: #{base_net_forward.1} parent=0 // loop_header_branch
    %16 = sbr.rel (%p14) target = $region8
  $region5: #{base_net_forward.1} parent=0 // loop_body
    %s18 = ssub.s32 %s13, 1
    %s19 = ssub.s32 %s13, 2
    %s20 = sadd.s32 %s13, 1
    %s21 = ssub.s32 %s13, %s20
    %p22 = scmp.eq.s32.totalorder %s21, 0
    %s24 = sadd.s32 %s23, 1
    %s25 = scalar_select %p22, %s23, %s24
    %p28 = pneg %p22
    %p29 = scmp.eq.s32.totalorder %s13, 1
    %p30 = por %p28, %p29
    %p31 = scmp.ne.s32.totalorder %s23, %s26
    %p32 = scmp.eq.s32.totalorder %s13, 0
    %p33 = por %p31, %p32
    %p34 = scmp.ne.s32.totalorder %s23, %s26
    %p35 = scmp.eq.s32.totalorder %s18, 1
    %p36 = por %p34, %p35
    %p37 = scmp.ne.s32.totalorder %s26, %s27
    %p38 = scmp.eq.s32.totalorder %s18, 0
    %p39 = por %p37, %p38
    %p40 = scmp.ne.s32.totalorder %s26, %s27
    %p41 = scmp.eq.s32.totalorder %s19, 1
    %p42 = por %p40, %p41
    %p44 = scmp.ne.s32.totalorder %s27, %s43
    %p45 = scmp.eq.s32.totalorder %s19, 0
    %p46 = por %p44, %p45
    %s48 = sadd.s32 %s47, 1
    %p51 = scmp.eq.s32.totalorder %s13, 1
    %p52 = scmp.ne.s32.totalorder %s47, %s49
    %p53 = scmp.eq.s32.totalorder %s13, 0
    %p54 = por %p52, %p53
    %p55 = scmp.ne.s32.totalorder %s47, %s49
    %p56 = scmp.eq.s32.totalorder %s18, 1
    %p57 = por %p55, %p56
    %p58 = scmp.ne.s32.totalorder %s49, %s50
    %p59 = scmp.eq.s32.totalorder %s18, 0
    %p60 = por %p58, %p59
    %p61 = scmp.ne.s32.totalorder %s49, %s50
    %p62 = scmp.eq.s32.totalorder %s19, 1
    %p63 = por %p61, %p62
    %p65 = scmp.ne.s32.totalorder %s50, %s64
    %p66 = scmp.eq.s32.totalorder %s19, 0
    %p67 = por %p65, %p66
    %s69 = sadd.s32 %s68, 1
    %p72 = scmp.eq.s32.totalorder %s13, 1
    %p73 = scmp.ne.s32.totalorder %s68, %s70
    %p74 = scmp.eq.s32.totalorder %s13, 0
    %p75 = por %p73, %p74
    %p76 = scmp.ne.s32.totalorder %s68, %s70
    %p77 = scmp.eq.s32.totalorder %s18, 1
    %p78 = por %p76, %p77
    %p79 = scmp.ne.s32.totalorder %s70, %s71
    %p80 = scmp.eq.s32.totalorder %s18, 0
    %p81 = por %p79, %p80
    %p82 = scmp.ne.s32.totalorder %s70, %s71
    %p83 = scmp.eq.s32.totalorder %s19, 1
    %p84 = por %p82, %p83
    %p86 = scmp.ne.s32.totalorder %s71, %s85
    %p87 = scmp.eq.s32.totalorder %s19, 0
    %p88 = por %p86, %p87
    %s90 = sadd.s32 %s89, 1
    %p93 = scmp.eq.s32.totalorder %s13, 1
    %p94 = scmp.ne.s32.totalorder %s89, %s91
    %p95 = scmp.eq.s32.totalorder %s13, 0
    %p96 = por %p94, %p95
    %p97 = scmp.ne.s32.totalorder %s89, %s91
    %p98 = scmp.eq.s32.totalorder %s18, 1
    %p99 = por %p97, %p98
    %p100 = scmp.ne.s32.totalorder %s91, %s92
    %p101 = scmp.eq.s32.totalorder %s18, 0
    %p102 = por %p100, %p101
    %p103 = scmp.ne.s32.totalorder %s91, %s92
    %p104 = scmp.eq.s32.totalorder %s19, 1
    %p105 = por %p103, %p104
    %p107 = scmp.ne.s32.totalorder %s92, %s106
    %p108 = scmp.eq.s32.totalorder %s19, 0
    %p109 = por %p107, %p108
    %s111 = sadd.s32 %s110, 1
    %p114 = scmp.eq.s32.totalorder %s13, 1
    %p115 = scmp.ne.s32.totalorder %s110, %s112
    %p116 = scmp.eq.s32.totalorder %s13, 0
    %p117 = por %p115, %p116
    %p118 = scmp.ne.s32.totalorder %s110, %s112
    %p119 = scmp.eq.s32.totalorder %s18, 1
    %p120 = por %p118, %p119
    %p121 = scmp.ne.s32.totalorder %s112, %s113
    %p122 = scmp.eq.s32.totalorder %s18, 0
    %p123 = por %p121, %p122
    %p124 = scmp.ne.s32.totalorder %s112, %s113
    %p125 = scmp.eq.s32.totalorder %s19, 1
    %p126 = por %p124, %p125
    %p128 = scmp.ne.s32.totalorder %s113, %s127
    %p129 = scmp.eq.s32.totalorder %s19, 0
    %p130 = por %p128, %p129
    %s132 = sadd.s32 %s131, 1
    %p135 = scmp.eq.s32.totalorder %s13, 1
    %p136 = scmp.ne.s32.totalorder %s131, %s133
    %p137 = scmp.eq.s32.totalorder %s13, 0
    %p138 = por %p136, %p137
    %p139 = scmp.ne.s32.totalorder %s131, %s133
    %p140 = scmp.eq.s32.totalorder %s18, 1
    %p141 = por %p139, %p140
    %p142 = scmp.ne.s32.totalorder %s133, %s134
    %p143 = scmp.eq.s32.totalorder %s18, 0
    %p144 = por %p142, %p143
    %p145 = scmp.ne.s32.totalorder %s133, %s134
    %p146 = scmp.eq.s32.totalorder %s19, 1
    %p147 = por %p145, %p146
    %p149 = scmp.ne.s32.totalorder %s134, %s148
    %p150 = scmp.eq.s32.totalorder %s19, 0
    %p151 = por %p149, %p150
    %s153 = sadd.s32 %s152, 1
    %p156 = scmp.eq.s32.totalorder %s13, 1
    %p157 = scmp.ne.s32.totalorder %s152, %s154
    %p158 = scmp.eq.s32.totalorder %s13, 0
    %p159 = por %p157, %p158
    %p160 = scmp.ne.s32.totalorder %s152, %s154
    %p161 = scmp.eq.s32.totalorder %s18, 1
    %p162 = por %p160, %p161
    %p163 = scmp.ne.s32.totalorder %s154, %s155
    %p164 = scmp.eq.s32.totalorder %s18, 0
    %p165 = por %p163, %p164
    %p166 = scmp.ne.s32.totalorder %s154, %s155
    %p167 = scmp.eq.s32.totalorder %s19, 1
    %p168 = por %p166, %p167
    %p170 = scmp.ne.s32.totalorder %s155, %s169
    %p171 = scmp.eq.s32.totalorder %s19, 0
    %p172 = por %p170, %p171
    %s173 = ssub.s32 %s13, %s20
    %p174 = scmp.eq.s32.totalorder %s173, 0
    %s176 = sadd.s32 %s175, 1
    %s177 = scalar_select %p174, %s175, %s176
    %p180 = pneg %p174
    %p181 = scmp.eq.s32.totalorder %s13, 1
    %p182 = por %p180, %p181
    %p183 = scmp.ne.s32.totalorder %s175, %s178
    %p184 = scmp.eq.s32.totalorder %s13, 0
    %p185 = por %p183, %p184
    %p186 = scmp.ne.s32.totalorder %s175, %s178
    %p187 = scmp.eq.s32.totalorder %s18, 1
    %p188 = por %p186, %p187
    %p189 = scmp.ne.s32.totalorder %s178, %s179
    %p190 = scmp.eq.s32.totalorder %s18, 0
    %p191 = por %p189, %p190
    %p192 = scmp.ne.s32.totalorder %s178, %s179
    %p193 = scmp.eq.s32.totalorder %s19, 1
    %p194 = por %p192, %p193
    %p196 = scmp.ne.s32.totalorder %s179, %s195
    %p197 = scmp.eq.s32.totalorder %s19, 0
    %p198 = por %p196, %p197
    %p199 = scmp.le.s32.totalorder 1, %s13
    %p200 = scmp.lt.s32.totalorder %s13, 3
    %p201 = pnand %p199, %p200
    %p202 = pneg %p201
    // Predicated region
    $region9: #{base_net_forward.1} parent=5 // pred_check
      _
    $region10: #{base_net_forward.1} parent=5 // pred_check_branch
      %204 = sbr.rel (%p201) target = $region12
    $region11: #{base_net_forward.1} parent=5 // pred_region
      %s205 = ssub.s32 %s13, 1
      // Predicated region
      $region13: #{base_net_forward.1} parent=11 // pred_check
        %p206 = pneg %p60
      $region14: #{base_net_forward.1} parent=11 // pred_check_branch
        %208 = sbr.rel (%p206) target = $region16
      $region15: #{base_net_forward.1} parent=11 // pred_region
        _
      $region16: #{base_net_forward.1} parent=11 // pred_fallthru
        _
      // Predicated region
      $region17: #{base_net_forward.1} parent=11 // pred_check
        %p209 = pneg %p81
      $region18: #{base_net_forward.1} parent=11 // pred_check_branch
        %211 = sbr.rel (%p209) target = $region20
      $region19: #{base_net_forward.1} parent=11 // pred_region
        _
      $region20: #{base_net_forward.1} parent=11 // pred_fallthru
        _
      // Predicated region
      $region21: #{base_net_forward.1} parent=11 // pred_check
        %p212 = pneg %p102
      $region22: #{base_net_forward.1} parent=11 // pred_check_branch
        %214 = sbr.rel (%p212) target = $region24
      $region23: #{base_net_forward.1} parent=11 // pred_region
        _
      $region24: #{base_net_forward.1} parent=11 // pred_fallthru
        _
      // Predicated region
      $region25: #{base_net_forward.1} parent=11 // pred_check
        %p215 = pneg %p123
      $region26: #{base_net_forward.1} parent=11 // pred_check_branch
        %217 = sbr.rel (%p215) target = $region28
      $region27: #{base_net_forward.1} parent=11 // pred_region
        _
      $region28: #{base_net_forward.1} parent=11 // pred_fallthru
        _
      // Predicated region
      $region29: #{base_net_forward.1} parent=11 // pred_check
        %p218 = pneg %p144
      $region30: #{base_net_forward.1} parent=11 // pred_check_branch
        %220 = sbr.rel (%p218) target = $region32
      $region31: #{base_net_forward.1} parent=11 // pred_region
        _
      $region32: #{base_net_forward.1} parent=11 // pred_fallthru
        _
      // Predicated region
      $region33: #{base_net_forward.1} parent=11 // pred_check
        %p221 = pneg %p165
      $region34: #{base_net_forward.1} parent=11 // pred_check_branch
        %223 = sbr.rel (%p221) target = $region36
      $region35: #{base_net_forward.1} parent=11 // pred_region
        _
      $region36: #{base_net_forward.1} parent=11 // pred_fallthru
        _
    $region12: #{base_net_forward.1} parent=5 // pred_fallthru
      _
    %p224 = scmp.lt.s32.totalorder %s13, 2
    // Predicated region
    $region37: #{base_net_forward.1} parent=5 // pred_check
      %p225 = pneg %p224
    $region38: #{base_net_forward.1} parent=5 // pred_check_branch
      %227 = sbr.rel (%p225) target = $region40
    $region39: #{base_net_forward.1} parent=5 // pred_region
      // Predicated region
      $region41: #{base_net_forward.1} parent=39 // pred_check
        %p228 = pneg %p33
      $region42: #{base_net_forward.1} parent=39 // pred_check_branch
        %230 = sbr.rel (%p228) target = $region44
      $region43: #{base_net_forward.1} parent=39 // pred_region
        %s231 = smul.u32 2, %s13
        %p232 = scmp.lt.s32.totalorder %s231, 3
        %s233 = scalar_select %p232, %s231, 3
        %s234 = smul.addr %s233, 4
        %s235 = scalar_lea.vmem %s0, %s234
        %s236 = smul.u32 2, %s13
      $region44: #{base_net_forward.1} parent=39 // pred_fallthru
        _
    $region40: #{base_net_forward.1} parent=5 // pred_fallthru
      _
    %p237 = scmp.le.s32.totalorder 1, %s13
    %p238 = scmp.lt.s32.totalorder %s13, 3
    %p239 = pnand %p237, %p238
    %p240 = pneg %p239
    // Predicated region
    $region45: #{base_net_forward.1} parent=5 // pred_check
      _
    $region46: #{base_net_forward.1} parent=5 // pred_check_branch
      %242 = sbr.rel (%p239) target = $region48
    $region47: #{base_net_forward.1} parent=5 // pred_region
      %s243 = ssub.s32 %s13, 1
      %s244 = smul.u32 2, %s18
      %p245 = scmp.lt.s32.totalorder %s244, 3
      %s246 = scalar_select %p245, %s244, 3
      %s247 = smul.addr %s246, 4
      %s248 = scalar_lea.vmem %s0, %s247
      %p249 = pneg %p39
      %p250 = pneg %p36
      %p251 = pneg %p60
      %p252 = pneg %p57
      %p253 = pneg %p81
      %p254 = pneg %p78
      %p255 = pneg %p102
      %p256 = pneg %p99
      %p257 = pneg %p123
      %p258 = pneg %p120
      %p259 = pneg %p144
      %p260 = pneg %p141
      %p261 = pneg %p165
      %p262 = pneg %p162
      %p263 = pneg %p191
      %p264 = pneg %p188
      %s265 = smul.u32 2, %s18
      %p266 = scmp.lt.s32.totalorder %s265, 3
      %s267 = scalar_select %p266, %s265, 3
      %s268 = smul.addr %s267, 2
      %s269 = scalar_lea.vmem %s7, %s268
      %s270 = smul.u32 2, %s18
      %p271 = scmp.lt.s32.totalorder %s270, 3
      %s272 = scalar_select %p271, %s270, 3
      %s273 = smul.addr %s272, 4
      %s274 = scalar_lea.vmem %s0, %s273
      %s275 = smul.u32 2, %s18
      %s276 = smul.u32 2, %s18
      %p277 = scmp.lt.s32.totalorder %s276, 3
      %s278 = scalar_select %p277, %s276, 3
      %s279 = smul.addr %s278, 2
      %s280 = scalar_lea.vmem %s7, %s279
      %s281 = smul.u32 2, %s18
      %v283 = vld [vmem:[%s274] sm:$0x77]
      %v284 = vld [vmem:[%s1] sm:$0xff]
      %v285 = vld [vmem:[%s1 + $0x8] sm:$0xff]
      %v286 = vld [vmem:[%s1 + $0x10] sm:$0xff]
      %v287 = vld [vmem:[%s1 + $0x18] sm:$0xff]
      %v288 = vld [vmem:[%s1 + $0x20] sm:$0xff]
      %v289 = vld [vmem:[%s1 + $0x28] sm:$0xff]
      %v290 = vld [vmem:[%s1 + $0x30] sm:$0xff]
      %v291 = vld [vmem:[%s1 + $0x38] sm:$0xff]
      %293 = vset.pattern.permute.xlu0 0
      %294 = vperm.xlu0 %293, %v284
      %v295 = vpop.permute.xlu0 %294
      %298 = vset.pattern.permute.xlu0 0
      %299 = vperm.xlu0 %298, %v285
      %v300 = vpop.permute.xlu0 %299
      %303 = vset.pattern.permute.xlu0 0
      %304 = vperm.xlu0 %303, %v286
      %v305 = vpop.permute.xlu0 %304
      %308 = vset.pattern.permute.xlu0 0
      %309 = vperm.xlu0 %308, %v287
      %v310 = vpop.permute.xlu0 %309
      %313 = vset.pattern.permute.xlu0 0
      %314 = vperm.xlu0 %313, %v288
      %v315 = vpop.permute.xlu0 %314
      %318 = vset.pattern.permute.xlu0 0
      %319 = vperm.xlu0 %318, %v289
      %v320 = vpop.permute.xlu0 %319
      %323 = vset.pattern.permute.xlu0 0
      %324 = vperm.xlu0 %323, %v290
      %v325 = vpop.permute.xlu0 %324
      %328 = vset.pattern.permute.xlu0 0
      %329 = vperm.xlu0 %328, %v291
      %v330 = vpop.permute.xlu0 %329
      %v333 = vlaneseq
      %v334 = vshrl.u32 %v333, 7
      %v335 = vsub.s32 0, %v334
      %v336 = vrot.slane %v283, %v335
      %v337 = vlaneseq
      %v338 = vshrl.u32 %v337, 7
      %v339 = vsub.s32 4, %v338
      %v340 = vrot.slane %v283, %v339
      %v343 = vlaneseq
      %v344 = vshrl.u32 %v343, 7
      %v345 = vsub.s32 0, %v344
      %v346 = vrot.slane %v336, %v345
      %v347 = vlaneseq
      %v348 = vshrl.u32 %v347, 7
      %v349 = vsub.s32 0, %v348
      %v350 = vrot.slane %v340, %v349
      %v351 = vmul.f32 %v295, %v346
      %v352 = vmul.f32 %v295, %v350
      %v353 = vmul.f32 %v300, %v346
      %v354 = vmul.f32 %v300, %v350
      %v355 = vmul.f32 %v305, %v346
      %v356 = vmul.f32 %v305, %v350
      %v357 = vmul.f32 %v310, %v346
      %v358 = vmul.f32 %v310, %v350
      %v359 = vmul.f32 %v315, %v346
      %v360 = vmul.f32 %v315, %v350
      %v361 = vmul.f32 %v320, %v346
      %v362 = vmul.f32 %v320, %v350
      %v363 = vmul.f32 %v325, %v346
      %v364 = vmul.f32 %v325, %v350
      %v365 = vmul.f32 %v330, %v346
      %v366 = vmul.f32 %v330, %v350
      %367 = vset.pattern.permute.xlu0 1
      %368 = vperm.xlu0 %367, %v284
      %v369 = vpop.permute.xlu0 %368
      %371 = vset.pattern.permute.xlu0 1
      %372 = vperm.xlu0 %371, %v285
      %v373 = vpop.permute.xlu0 %372
      %375 = vset.pattern.permute.xlu0 1
      %376 = vperm.xlu0 %375, %v286
      %v377 = vpop.permute.xlu0 %376
      %379 = vset.pattern.permute.xlu0 1
      %380 = vperm.xlu0 %379, %v287
      %v381 = vpop.permute.xlu0 %380
      %383 = vset.pattern.permute.xlu0 1
      %384 = vperm.xlu0 %383, %v288
      %v385 = vpop.permute.xlu0 %384
      %387 = vset.pattern.permute.xlu0 1
      %388 = vperm.xlu0 %387, %v289
      %v389 = vpop.permute.xlu0 %388
      %391 = vset.pattern.permute.xlu0 1
      %392 = vperm.xlu0 %391, %v290
      %v393 = vpop.permute.xlu0 %392
      %395 = vset.pattern.permute.xlu0 1
      %396 = vperm.xlu0 %395, %v291
      %v397 = vpop.permute.xlu0 %396
      %v399 = vlaneseq
      %v400 = vshrl.u32 %v399, 7
      %v401 = vsub.s32 1, %v400
      %v402 = vrot.slane %v283, %v401
      %v403 = vlaneseq
      %v404 = vshrl.u32 %v403, 7
      %v405 = vsub.s32 5, %v404
      %v406 = vrot.slane %v283, %v405
      %v409 = vlaneseq
      %v410 = vshrl.u32 %v409, 7
      %v411 = vsub.s32 1, %v410
      %v412 = vrot.slane %v402, %v411
      %v413 = vlaneseq
      %v414 = vshrl.u32 %v413, 7
      %v415 = vsub.s32 1, %v414
      %v416 = vrot.slane %v406, %v415
      %v417 = vmul.f32 %v369, %v412
      %v418 = vmul.f32 %v369, %v416
      %v419 = vmul.f32 %v373, %v412
      %v420 = vmul.f32 %v373, %v416
      %v421 = vmul.f32 %v377, %v412
      %v422 = vmul.f32 %v377, %v416
      %v423 = vmul.f32 %v381, %v412
      %v424 = vmul.f32 %v381, %v416
      %v425 = vmul.f32 %v385, %v412
      %v426 = vmul.f32 %v385, %v416
      %v427 = vmul.f32 %v389, %v412
      %v428 = vmul.f32 %v389, %v416
      %v429 = vmul.f32 %v393, %v412
      %v430 = vmul.f32 %v393, %v416
      %v431 = vmul.f32 %v397, %v412
      %v432 = vmul.f32 %v397, %v416
      %v433 = vadd.f32 %v351, %v417
      %v434 = vadd.f32 %v352, %v418
      %v435 = vadd.f32 %v353, %v419
      %v436 = vadd.f32 %v354, %v420
      %v437 = vadd.f32 %v355, %v421
      %v438 = vadd.f32 %v356, %v422
      %v439 = vadd.f32 %v357, %v423
      %v440 = vadd.f32 %v358, %v424
      %v441 = vadd.f32 %v359, %v425
      %v442 = vadd.f32 %v360, %v426
      %v443 = vadd.f32 %v361, %v427
      %v444 = vadd.f32 %v362, %v428
      %v445 = vadd.f32 %v363, %v429
      %v446 = vadd.f32 %v364, %v430
      %v447 = vadd.f32 %v365, %v431
      %v448 = vadd.f32 %v366, %v432
      %449 = vset.pattern.permute.xlu0 2
      %450 = vperm.xlu0 %449, %v284
      %v451 = vpop.permute.xlu0 %450
      %453 = vset.pattern.permute.xlu0 2
      %454 = vperm.xlu0 %453, %v285
      %v455 = vpop.permute.xlu0 %454
      %457 = vset.pattern.permute.xlu0 2
      %458 = vperm.xlu0 %457, %v286
      %v459 = vpop.permute.xlu0 %458
      %461 = vset.pattern.permute.xlu0 2
      %462 = vperm.xlu0 %461, %v287
      %v463 = vpop.permute.xlu0 %462
      %465 = vset.pattern.permute.xlu0 2
      %466 = vperm.xlu0 %465, %v288
      %v467 = vpop.permute.xlu0 %466
      %469 = vset.pattern.permute.xlu0 2
      %470 = vperm.xlu0 %469, %v289
      %v471 = vpop.permute.xlu0 %470
      %473 = vset.pattern.permute.xlu0 2
      %474 = vperm.xlu0 %473, %v290
      %v475 = vpop.permute.xlu0 %474
      %477 = vset.pattern.permute.xlu0 2
      %478 = vperm.xlu0 %477, %v291
      %v479 = vpop.permute.xlu0 %478
      %v481 = vlaneseq
      %v482 = vshrl.u32 %v481, 7
      %v483 = vsub.s32 2, %v482
      %v484 = vrot.slane %v283, %v483
      %v485 = vlaneseq
      %v486 = vshrl.u32 %v485, 7
      %v487 = vsub.s32 6, %v486
      %v488 = vrot.slane %v283, %v487
      %v491 = vlaneseq
      %v492 = vshrl.u32 %v491, 7
      %v493 = vsub.s32 2, %v492
      %v494 = vrot.slane %v484, %v493
      %v495 = vlaneseq
      %v496 = vshrl.u32 %v495, 7
      %v497 = vsub.s32 2, %v496
      %v498 = vrot.slane %v488, %v497
      %v499 = vmul.f32 %v451, %v494
      %v500 = vmul.f32 %v451, %v498
      %v501 = vmul.f32 %v455, %v494
      %v502 = vmul.f32 %v455, %v498
      %v503 = vmul.f32 %v459, %v494
      %v504 = vmul.f32 %v459, %v498
      %v505 = vmul.f32 %v463, %v494
      %v506 = vmul.f32 %v463, %v498
      %v507 = vmul.f32 %v467, %v494
      %v508 = vmul.f32 %v467, %v498
      %v509 = vmul.f32 %v471, %v494
      %v510 = vmul.f32 %v471, %v498
      %v511 = vmul.f32 %v475, %v494
      %v512 = vmul.f32 %v475, %v498
      %v513 = vmul.f32 %v479, %v494
      %v514 = vmul.f32 %v479, %v498
      %v515 = vadd.f32 %v433, %v499
      %v516 = vadd.f32 %v434, %v500
      %v517 = vadd.f32 %v435, %v501
      %v518 = vadd.f32 %v436, %v502
      %v519 = vadd.f32 %v437, %v503
      %v520 = vadd.f32 %v438, %v504
      %v521 = vadd.f32 %v439, %v505
      %v522 = vadd.f32 %v440, %v506
      %v523 = vadd.f32 %v441, %v507
      %v524 = vadd.f32 %v442, %v508
      %v525 = vadd.f32 %v443, %v509
      %v526 = vadd.f32 %v444, %v510
      %v527 = vadd.f32 %v445, %v511
      %v528 = vadd.f32 %v446, %v512
      %v529 = vadd.f32 %v447, %v513
      %v530 = vadd.f32 %v448, %v514
      %v531 = vld [vmem:[%s2] sm:$0xff]
      %v532 = vld [vmem:[%s2 + $0x8] sm:$0xff]
      %v533 = vld [vmem:[%s2 + $0x10] sm:$0xff]
      %v534 = vld [vmem:[%s2 + $0x18] sm:$0xff]
      %v535 = vld [vmem:[%s2 + $0x20] sm:$0xff]
      %v536 = vld [vmem:[%s2 + $0x28] sm:$0xff]
      %v537 = vld [vmem:[%s2 + $0x30] sm:$0xff]
      %v538 = vld [vmem:[%s2 + $0x38] sm:$0xff]
      %540 = vset.pattern.permute.xlu0 0
      %541 = vperm.xlu0 %540, %v531
      %v542 = vpop.permute.xlu0 %541
      %545 = vset.pattern.permute.xlu0 0
      %546 = vperm.xlu0 %545, %v532
      %v547 = vpop.permute.xlu0 %546
      %550 = vset.pattern.permute.xlu0 0
      %551 = vperm.xlu0 %550, %v533
      %v552 = vpop.permute.xlu0 %551
      %555 = vset.pattern.permute.xlu0 0
      %556 = vperm.xlu0 %555, %v534
      %v557 = vpop.permute.xlu0 %556
      %560 = vset.pattern.permute.xlu0 0
      %561 = vperm.xlu0 %560, %v535
      %v562 = vpop.permute.xlu0 %561
      %565 = vset.pattern.permute.xlu0 0
      %566 = vperm.xlu0 %565, %v536
      %v567 = vpop.permute.xlu0 %566
      %570 = vset.pattern.permute.xlu0 0
      %571 = vperm.xlu0 %570, %v537
      %v572 = vpop.permute.xlu0 %571
      %575 = vset.pattern.permute.xlu0 0
      %576 = vperm.xlu0 %575, %v538
      %v577 = vpop.permute.xlu0 %576
      %v579 = vadd.f32 %v515, %v542
      %v580 = vadd.f32 %v516, %v542
      %v581 = vadd.f32 %v517, %v547
      %v582 = vadd.f32 %v518, %v547
      %v583 = vadd.f32 %v519, %v552
      %v584 = vadd.f32 %v520, %v552
      %v585 = vadd.f32 %v521, %v557
      %v586 = vadd.f32 %v522, %v557
      %v587 = vadd.f32 %v523, %v562
      %v588 = vadd.f32 %v524, %v562
      %v589 = vadd.f32 %v525, %v567
      %v590 = vadd.f32 %v526, %v567
      %v591 = vadd.f32 %v527, %v572
      %v592 = vadd.f32 %v528, %v572
      %v593 = vadd.f32 %v529, %v577
      %v594 = vadd.f32 %v530, %v577
      %v595 = vtanh.pop %v579
      %v596 = vtanh.pop %v580
      %v597 = vtanh.pop %v581
      %v598 = vtanh.pop %v582
      %v599 = vtanh.pop %v583
      %v600 = vtanh.pop %v584
      %v601 = vtanh.pop %v585
      %v602 = vtanh.pop %v586
      %v603 = vtanh.pop %v587
      %v604 = vtanh.pop %v588
      %v605 = vtanh.pop %v589
      %v606 = vtanh.pop %v590
      %v607 = vtanh.pop %v591
      %v608 = vtanh.pop %v592
      %v609 = vtanh.pop %v593
      %v610 = vtanh.pop %v594
      %v611 = vpack.c.bf16 %v597, %v595
      %v612 = vpack.c.bf16 %v598, %v596
      %v613 = vpack.c.bf16 %v601, %v599
      %v614 = vpack.c.bf16 %v602, %v600
      %v615 = vpack.c.bf16 %v605, %v603
      %v616 = vpack.c.bf16 %v606, %v604
      %v617 = vpack.c.bf16 %v609, %v607
      %v618 = vpack.c.bf16 %v610, %v608
      %v619 = vld [vmem:[%s3] sm:$0xf]
      %v620 = vld [vmem:[%s3 + $0x4] sm:$0xf]
      %v621 = vld [vmem:[%s3 + $0x8] sm:$0xf]
      %v622 = vld [vmem:[%s3 + $0xc] sm:$0xf]
      %v623 = vld [vmem:[%s3 + $0x10] sm:$0xf]
      %v624 = vld [vmem:[%s3 + $0x14] sm:$0xf]
      %v625 = vld [vmem:[%s3 + $0x18] sm:$0xf]
      %v626 = vld [vmem:[%s3 + $0x1c] sm:$0xf]
      %v627 = vld [vmem:[%s4] sm:$0xff]
      %v628 = vld [vmem:[%s4 + $0x8] sm:$0xff]
      %v629 = vld [vmem:[%s4 + $0x10] sm:$0xff]
      %v630 = vld [vmem:[%s4 + $0x18] sm:$0xff]
      %v631 = vld [vmem:[%s4 + $0x20] sm:$0xff]
      %v632 = vld [vmem:[%s4 + $0x28] sm:$0xff]
      %v633 = vld [vmem:[%s4 + $0x30] sm:$0xff]
      %v634 = vld [vmem:[%s4 + $0x38] sm:$0xff]
      %636 = vset.pattern.permute.xlu0 0
      %637 = vperm.xlu0 %636, %v627
      %v638 = vpop.permute.xlu0 %637
      %641 = vset.pattern.permute.xlu0 0
      %642 = vperm.xlu0 %641, %v628
      %v643 = vpop.permute.xlu0 %642
      %646 = vset.pattern.permute.xlu0 0
      %647 = vperm.xlu0 %646, %v629
      %v648 = vpop.permute.xlu0 %647
      %651 = vset.pattern.permute.xlu0 0
      %652 = vperm.xlu0 %651, %v630
      %v653 = vpop.permute.xlu0 %652
      %656 = vset.pattern.permute.xlu0 0
      %657 = vperm.xlu0 %656, %v631
      %v658 = vpop.permute.xlu0 %657
      %661 = vset.pattern.permute.xlu0 0
      %662 = vperm.xlu0 %661, %v632
      %v663 = vpop.permute.xlu0 %662
      %666 = vset.pattern.permute.xlu0 0
      %667 = vperm.xlu0 %666, %v633
      %v668 = vpop.permute.xlu0 %667
      %671 = vset.pattern.permute.xlu0 0
      %672 = vperm.xlu0 %671, %v634
      %v673 = vpop.permute.xlu0 %672
      %v683 = vunpack.c.l.b16 %v619
      %v684 = vunpack.c.l.b16 %v620
      %v685 = vunpack.c.l.b16 %v621
      %v686 = vunpack.c.l.b16 %v622
      %v687 = vunpack.c.l.b16 %v623
      %v688 = vunpack.c.l.b16 %v624
      %v689 = vunpack.c.l.b16 %v625
      %v690 = vunpack.c.l.b16 %v626
      %v691 = vpack.c.b16 %v684, %v683
      %v692 = vpack.c.b16 %v686, %v685
      %v693 = vpack.c.b16 %v688, %v687
      %v694 = vpack.c.b16 %v690, %v689
      %vm695 = vcmask 523264
      %v697 = vsel %vm695, %v691, 0
      %v700 = vsel %vm695, %v692, 0
      %v703 = vsel %vm695, %v693, 0
      %v706 = vsel %vm695, %v694, 0
      %708 = vmatprep.subr.bf16.mxu0 %v612
      %709 = vmatpush1.bf16.msra.mxu0 %v611
      %710 = vmatprep.subr.bf16.mxu0 %v614
      %711 = vmatpush1.bf16.msra.mxu0 %v613
      %712 = vmatprep.subr.bf16.mxu0 %v616
      %713 = vmatpush1.bf16.msra.mxu0 %v615
      %714 = vmatprep.subr.bf16.mxu0 %v618
      %715 = vmatpush1.bf16.msra.mxu0 %v617
      %716 = vmatprep.subr.bf16.mxu0 0
      %717 = vmatpush1.bf16.msra.mxu0 0
      %718 = vmatprep.subr.bf16.mxu0 0
      %719 = vmatpush1.bf16.msra.mxu0 0
      %720 = vmatprep.subr.bf16.mxu0 0
      %721 = vmatpush1.bf16.msra.mxu0 0
      %722 = vmatprep.subr.bf16.mxu0 0
      %723 = vmatpush1.bf16.msra.mxu0 0
      %724 = vmatprep.subr.bf16.mxu0 0
      %725 = vmatpush1.bf16.msra.mxu0 0
      %726 = vmatprep.subr.bf16.mxu0 0
      %727 = vmatpush1.bf16.msra.mxu0 0
      %728 = vmatprep.subr.bf16.mxu0 0
      %729 = vmatpush1.bf16.msra.mxu0 0
      %730 = vmatprep.subr.bf16.mxu0 0
      %731 = vmatpush1.bf16.msra.mxu0 0
      %732 = vmatprep.subr.bf16.mxu0 0
      %733 = vmatpush1.bf16.msra.mxu0 0
      %734 = vmatprep.subr.bf16.mxu0 0
      %735 = vmatpush1.bf16.msra.mxu0 0
      %736 = vmatprep.subr.bf16.mxu0 0
      %737 = vmatpush1.bf16.msra.mxu0 0
      %738 = vmatprep.subr.bf16.mxu0 0
      %739 = vmatpush1.bf16.msra.mxu0 0
      %740 = vmatprep.mubr.bf16.mxu0 0
      %741 = vmatmul.mubr.bf16.gmra.mrb[0].mxu0 %v697
      %v742 = vpop.f32.mrb[0].mxu0
      %v743 = vadd.f32 %v638, %v742
      %v744 = vpop.f32.mrb[0].mxu0
      %v745 = vadd.f32 %v638, %v744
      %v746 = vpop.f32.mrb[0].mxu0
      %v747 = vadd.f32 %v643, %v746
      %v748 = vpop.f32.mrb[0].mxu0
      %v749 = vadd.f32 %v643, %v748
      %750 = vmatprep.mubr.bf16.mxu0 0
      %751 = vmatmul.mubr.bf16.gmra.mrb[0].mxu0 %v700
      %v752 = vpop.f32.mrb[0].mxu0
      %v753 = vadd.f32 %v648, %v752
      %v754 = vpop.f32.mrb[0].mxu0
      %v755 = vadd.f32 %v648, %v754
      %v756 = vpop.f32.mrb[0].mxu0
      %v757 = vadd.f32 %v653, %v756
      %v758 = vpop.f32.mrb[0].mxu0
      %v759 = vadd.f32 %v653, %v758
      %760 = vmatprep.mubr.bf16.mxu0 0
      %761 = vmatmul.mubr.bf16.gmra.mrb[0].mxu0 %v703
      %v762 = vpop.f32.mrb[0].mxu0
      %v763 = vadd.f32 %v658, %v762
      %v764 = vpop.f32.mrb[0].mxu0
      %v765 = vadd.f32 %v658, %v764
      %v766 = vpop.f32.mrb[0].mxu0
      %v767 = vadd.f32 %v663, %v766
      %v768 = vpop.f32.mrb[0].mxu0
      %v769 = vadd.f32 %v663, %v768
      %770 = vmatprep.mubr.bf16.mxu0 0
      %771 = vmatmul.mubr.bf16.gmra.mrb[0].mxu0 %v706
      %v772 = vpop.f32.mrb[0].mxu0
      %v773 = vadd.f32 %v668, %v772
      %v774 = vpop.f32.mrb[0].mxu0
      %v775 = vadd.f32 %v668, %v774
      %v776 = vpop.f32.mrb[0].mxu0
      %v777 = vadd.f32 %v673, %v776
      %v778 = vpop.f32.mrb[0].mxu0
      %v779 = vadd.f32 %v673, %v778
      %780 = vdwg.mxu0
      %v781 = vtanh.pop %v743
      %v782 = vtanh.pop %v745
      %v783 = vtanh.pop %v747
      %v784 = vtanh.pop %v749
      %v785 = vtanh.pop %v753
      %v786 = vtanh.pop %v755
      %v787 = vtanh.pop %v757
      %v788 = vtanh.pop %v759
      %v789 = vtanh.pop %v763
      %v790 = vtanh.pop %v765
      %v791 = vtanh.pop %v767
      %v792 = vtanh.pop %v769
      %v793 = vtanh.pop %v773
      %v794 = vtanh.pop %v775
      %v795 = vtanh.pop %v777
      %v796 = vtanh.pop %v779
      %v797 = vpack.c.bf16 %v783, %v781
      %v798 = vpack.c.bf16 %v784, %v782
      %v799 = vpack.c.bf16 %v787, %v785
      %v800 = vpack.c.bf16 %v788, %v786
      %v801 = vpack.c.bf16 %v791, %v789
      %v802 = vpack.c.bf16 %v792, %v790
      %v803 = vpack.c.bf16 %v795, %v793
      %v804 = vpack.c.bf16 %v796, %v794
      %s805 = scalar_lea.vmem %s3, 32
      %v806 = vld [vmem:[%s805] sm:$0xf]
      %v807 = vld [vmem:[%s805 + $0x4] sm:$0xf]
      %v808 = vld [vmem:[%s805 + $0x8] sm:$0xf]
      %v809 = vld [vmem:[%s805 + $0xc] sm:$0xf]
      %v810 = vld [vmem:[%s805 + $0x10] sm:$0xf]
      %v811 = vld [vmem:[%s805 + $0x14] sm:$0xf]
      %v812 = vld [vmem:[%s805 + $0x18] sm:$0xf]
      %v813 = vld [vmem:[%s805 + $0x1c] sm:$0xf]
      %814 = vset.pattern.permute.xlu0 1
      %815 = vperm.xlu0 %814, %v627
      %v816 = vpop.permute.xlu0 %815
      %818 = vset.pattern.permute.xlu0 1
      %819 = vperm.xlu0 %818, %v628
      %v820 = vpop.permute.xlu0 %819
      %822 = vset.pattern.permute.xlu0 1
      %823 = vperm.xlu0 %822, %v629
      %v824 = vpop.permute.xlu0 %823
      %826 = vset.pattern.permute.xlu0 1
      %827 = vperm.xlu0 %826, %v630
      %v828 = vpop.permute.xlu0 %827
      %830 = vset.pattern.permute.xlu0 1
      %831 = vperm.xlu0 %830, %v631
      %v832 = vpop.permute.xlu0 %831
      %834 = vset.pattern.permute.xlu0 1
      %835 = vperm.xlu0 %834, %v632
      %v836 = vpop.permute.xlu0 %835
      %838 = vset.pattern.permute.xlu0 1
      %839 = vperm.xlu0 %838, %v633
      %v840 = vpop.permute.xlu0 %839
      %842 = vset.pattern.permute.xlu0 1
      %843 = vperm.xlu0 %842, %v634
      %v844 = vpop.permute.xlu0 %843
      %v854 = vunpack.c.l.b16 %v806
      %v855 = vunpack.c.l.b16 %v807
      %v856 = vunpack.c.l.b16 %v808
      %v857 = vunpack.c.l.b16 %v809
      %v858 = vunpack.c.l.b16 %v810
      %v859 = vunpack.c.l.b16 %v811
      %v860 = vunpack.c.l.b16 %v812
      %v861 = vunpack.c.l.b16 %v813
      %v862 = vpack.c.b16 %v855, %v854
      %v863 = vpack.c.b16 %v857, %v856
      %v864 = vpack.c.b16 %v859, %v858
      %v865 = vpack.c.b16 %v861, %v860
      %v867 = vsel %vm695, %v862, 0
      %v870 = vsel %vm695, %v863, 0
      %v873 = vsel %vm695, %v864, 0
      %v876 = vsel %vm695, %v865, 0
      %878 = vmatprep.subr.bf16.mxu0 %v798
      %879 = vmatpush1.bf16.msra.mxu0 %v797
      %880 = vmatprep.subr.bf16.mxu0 %v800
      %881 = vmatpush1.bf16.msra.mxu0 %v799
      %882 = vmatprep.subr.bf16.mxu0 %v802
      %883 = vmatpush1.bf16.msra.mxu0 %v801
      %884 = vmatprep.subr.bf16.mxu0 %v804
      %885 = vmatpush1.bf16.msra.mxu0 %v803
      %886 = vmatprep.subr.bf16.mxu0 0
      %887 = vmatpush1.bf16.msra.mxu0 0
      %888 = vmatprep.subr.bf16.mxu0 0
      %889 = vmatpush1.bf16.msra.mxu0 0
      %890 = vmatprep.subr.bf16.mxu0 0
      %891 = vmatpush1.bf16.msra.mxu0 0
      %892 = vmatprep.subr.bf16.mxu0 0
      %893 = vmatpush1.bf16.msra.mxu0 0
      %894 = vmatprep.subr.bf16.mxu0 0
      %895 = vmatpush1.bf16.msra.mxu0 0
      %896 = vmatprep.subr.bf16.mxu0 0
      %897 = vmatpush1.bf16.msra.mxu0 0
      %898 = vmatprep.subr.bf16.mxu0 0
      %899 = vmatpush1.bf16.msra.mxu0 0
      %900 = vmatprep.subr.bf16.mxu0 0
      %901 = vmatpush1.bf16.msra.mxu0 0
      %902 = vmatprep.subr.bf16.mxu0 0
      %903 = vmatpush1.bf16.msra.mxu0 0
      %904 = vmatprep.subr.bf16.mxu0 0
      %905 = vmatpush1.bf16.msra.mxu0 0
      %906 = vmatprep.subr.bf16.mxu0 0
      %907 = vmatpush1.bf16.msra.mxu0 0
      %908 = vmatprep.subr.bf16.mxu0 0
      %909 = vmatpush1.bf16.msra.mxu0 0
      %910 = vmatprep.mubr.bf16.mxu0 0
      %911 = vmatmul.mubr.bf16.gmra.mrb[0].mxu0 %v867
      %v912 = vpop.f32.mrb[0].mxu0
      %v913 = vadd.f32 %v816, %v912
      %v914 = vpop.f32.mrb[0].mxu0
      %v915 = vadd.f32 %v816, %v914
      %v916 = vpop.f32.mrb[0].mxu0
      %v917 = vadd.f32 %v820, %v916
      %v918 = vpop.f32.mrb[0].mxu0
      %v919 = vadd.f32 %v820, %v918
      %920 = vmatprep.mubr.bf16.mxu0 0
      %921 = vmatmul.mubr.bf16.gmra.mrb[0].mxu0 %v870
      %v922 = vpop.f32.mrb[0].mxu0
      %v923 = vadd.f32 %v824, %v922
      %v924 = vpop.f32.mrb[0].mxu0
      %v925 = vadd.f32 %v824, %v924
      %v926 = vpop.f32.mrb[0].mxu0
      %v927 = vadd.f32 %v828, %v926
      %v928 = vpop.f32.mrb[0].mxu0
      %v929 = vadd.f32 %v828, %v928
      %930 = vmatprep.mubr.bf16.mxu0 0
      %931 = vmatmul.mubr.bf16.gmra.mrb[0].mxu0 %v873
      %v932 = vpop.f32.mrb[0].mxu0
      %v933 = vadd.f32 %v832, %v932
      %v934 = vpop.f32.mrb[0].mxu0
      %v935 = vadd.f32 %v832, %v934
      %v936 = vpop.f32.mrb[0].mxu0
      %v937 = vadd.f32 %v836, %v936
      %v938 = vpop.f32.mrb[0].mxu0
      %v939 = vadd.f32 %v836, %v938
      %940 = vmatprep.mubr.bf16.mxu0 0
      %941 = vmatmul.mubr.bf16.gmra.mrb[0].mxu0 %v876
      %v942 = vpop.f32.mrb[0].mxu0
      %v943 = vadd.f32 %v840, %v942
      %v944 = vpop.f32.mrb[0].mxu0
      %v945 = vadd.f32 %v840, %v944
      %v946 = vpop.f32.mrb[0].mxu0
      %v947 = vadd.f32 %v844, %v946
      %v948 = vpop.f32.mrb[0].mxu0
      %v949 = vadd.f32 %v844, %v948
      %950 = vdwg.mxu0
      %v951 = vtanh.pop %v913
      %v952 = vtanh.pop %v915
      %v953 = vtanh.pop %v917
      %v954 = vtanh.pop %v919
      %v955 = vtanh.pop %v923
      %v956 = vtanh.pop %v925
      %v957 = vtanh.pop %v927
      %v958 = vtanh.pop %v929
      %v959 = vtanh.pop %v933
      %v960 = vtanh.pop %v935
      %v961 = vtanh.pop %v937
      %v962 = vtanh.pop %v939
      %v963 = vtanh.pop %v943
      %v964 = vtanh.pop %v945
      %v965 = vtanh.pop %v947
      %v966 = vtanh.pop %v949
      %v967 = vpack.c.bf16 %v953, %v951
      %v968 = vpack.c.bf16 %v954, %v952
      %v969 = vpack.c.bf16 %v957, %v955
      %v970 = vpack.c.bf16 %v958, %v956
      %v971 = vpack.c.bf16 %v961, %v959
      %v972 = vpack.c.bf16 %v962, %v960
      %v973 = vpack.c.bf16 %v965, %v963
      %v974 = vpack.c.bf16 %v966, %v964
      %s975 = scalar_lea.vmem %s3, 64
      %v976 = vld [vmem:[%s975] sm:$0xf]
      %v977 = vld [vmem:[%s975 + $0x4] sm:$0xf]
      %v978 = vld [vmem:[%s975 + $0x8] sm:$0xf]
      %v979 = vld [vmem:[%s975 + $0xc] sm:$0xf]
      %v980 = vld [vmem:[%s975 + $0x10] sm:$0xf]
      %v981 = vld [vmem:[%s975 + $0x14] sm:$0xf]
      %v982 = vld [vmem:[%s975 + $0x18] sm:$0xf]
      %v983 = vld [vmem:[%s975 + $0x1c] sm:$0xf]
      %984 = vset.pattern.permute.xlu0 2
      %985 = vperm.xlu0 %984, %v627
      %v986 = vpop.permute.xlu0 %985
      %988 = vset.pattern.permute.xlu0 2
      %989 = vperm.xlu0 %988, %v628
      %v990 = vpop.permute.xlu0 %989
      %992 = vset.pattern.permute.xlu0 2
      %993 = vperm.xlu0 %992, %v629
      %v994 = vpop.permute.xlu0 %993
      %996 = vset.pattern.permute.xlu0 2
      %997 = vperm.xlu0 %996, %v630
      %v998 = vpop.permute.xlu0 %997
      %1000 = vset.pattern.permute.xlu0 2
      %1001 = vperm.xlu0 %1000, %v631
      %v1002 = vpop.permute.xlu0 %1001
      %1004 = vset.pattern.permute.xlu0 2
      %1005 = vperm.xlu0 %1004, %v632
      %v1006 = vpop.permute.xlu0 %1005
      %1008 = vset.pattern.permute.xlu0 2
      %1009 = vperm.xlu0 %1008, %v633
      %v1010 = vpop.permute.xlu0 %1009
      %1012 = vset.pattern.permute.xlu0 2
      %1013 = vperm.xlu0 %1012, %v634
      %v1014 = vpop.permute.xlu0 %1013
      %v1024 = vunpack.c.l.b16 %v976
      %v1025 = vunpack.c.l.b16 %v977
      %v1026 = vunpack.c.l.b16 %v978
      %v1027 = vunpack.c.l.b16 %v979
      %v1028 = vunpack.c.l.b16 %v980
      %v1029 = vunpack.c.l.b16 %v981
      %v1030 = vunpack.c.l.b16 %v982
      %v1031 = vunpack.c.l.b16 %v983
      %v1032 = vpack.c.b16 %v1025, %v1024
      %v1033 = vpack.c.b16 %v1027, %v1026
      %v1034 = vpack.c.b16 %v1029, %v1028
      %v1035 = vpack.c.b16 %v1031, %v1030
      %v1037 = vsel %vm695, %v1032, 0
      %v1040 = vsel %vm695, %v1033, 0
      %v1043 = vsel %vm695, %v1034, 0
      %v1046 = vsel %vm695, %v1035, 0
      %1048 = vmatprep.subr.bf16.mxu0 %v968
      %1049 = vmatpush1.bf16.msra.mxu0 %v967
      %1050 = vmatprep.subr.bf16.mxu0 %v970
      %1051 = vmatpush1.bf16.msra.mxu0 %v969
      %1052 = vmatprep.subr.bf16.mxu0 %v972
      %1053 = vmatpush1.bf16.msra.mxu0 %v971
      %1054 = vmatprep.subr.bf16.mxu0 %v974
      %1055 = vmatpush1.bf16.msra.mxu0 %v973
      %1056 = vmatprep.subr.bf16.mxu0 0
      %1057 = vmatpush1.bf16.msra.mxu0 0
      %1058 = vmatprep.subr.bf16.mxu0 0
      %1059 = vmatpush1.bf16.msra.mxu0 0
      %1060 = vmatprep.subr.bf16.mxu0 0
      %1061 = vmatpush1.bf16.msra.mxu0 0
      %1062 = vmatprep.subr.bf16.mxu0 0
      %1063 = vmatpush1.bf16.msra.mxu0 0
      %1064 = vmatprep.subr.bf16.mxu0 0
      %1065 = vmatpush1.bf16.msra.mxu0 0
      %1066 = vmatprep.subr.bf16.mxu0 0
      %1067 = vmatpush1.bf16.msra.mxu0 0
      %1068 = vmatprep.subr.bf16.mxu0 0
      %1069 = vmatpush1.bf16.msra.mxu0 0
      %1070 = vmatprep.subr.bf16.mxu0 0
      %1071 = vmatpush1.bf16.msra.mxu0 0
      %1072 = vmatprep.subr.bf16.mxu0 0
      %1073 = vmatpush1.bf16.msra.mxu0 0
      %1074 = vmatprep.subr.bf16.mxu0 0
      %1075 = vmatpush1.bf16.msra.mxu0 0
      %1076 = vmatprep.subr.bf16.mxu0 0
      %1077 = vmatpush1.bf16.msra.mxu0 0
      %1078 = vmatprep.subr.bf16.mxu0 0
      %1079 = vmatpush1.bf16.msra.mxu0 0
      %1080 = vmatprep.mubr.bf16.mxu0 0
      %1081 = vmatmul.mubr.bf16.gmra.mrb[0].mxu0 %v1037
      %v1082 = vpop.f32.mrb[0].mxu0
      %v1083 = vadd.f32 %v986, %v1082
      %v1084 = vpop.f32.mrb[0].mxu0
      %v1085 = vadd.f32 %v986, %v1084
      %v1086 = vpop.f32.mrb[0].mxu0
      %v1087 = vadd.f32 %v990, %v1086
      %v1088 = vpop.f32.mrb[0].mxu0
      %v1089 = vadd.f32 %v990, %v1088
      %1090 = vmatprep.mubr.bf16.mxu0 0
      %1091 = vmatmul.mubr.bf16.gmra.mrb[0].mxu0 %v1040
      %v1092 = vpop.f32.mrb[0].mxu0
      %v1093 = vadd.f32 %v994, %v1092
      %v1094 = vpop.f32.mrb[0].mxu0
      %v1095 = vadd.f32 %v994, %v1094
      %v1096 = vpop.f32.mrb[0].mxu0
      %v1097 = vadd.f32 %v998, %v1096
      %v1098 = vpop.f32.mrb[0].mxu0
      %v1099 = vadd.f32 %v998, %v1098
      %1100 = vmatprep.mubr.bf16.mxu0 0
      %1101 = vmatmul.mubr.bf16.gmra.mrb[0].mxu0 %v1043
      %v1102 = vpop.f32.mrb[0].mxu0
      %v1103 = vadd.f32 %v1002, %v1102
      %v1104 = vpop.f32.mrb[0].mxu0
      %v1105 = vadd.f32 %v1002, %v1104
      %v1106 = vpop.f32.mrb[0].mxu0
      %v1107 = vadd.f32 %v1006, %v1106
      %v1108 = vpop.f32.mrb[0].mxu0
      %v1109 = vadd.f32 %v1006, %v1108
      %1110 = vmatprep.mubr.bf16.mxu0 0
      %1111 = vmatmul.mubr.bf16.gmra.mrb[0].mxu0 %v1046
      %v1112 = vpop.f32.mrb[0].mxu0
      %v1113 = vadd.f32 %v1010, %v1112
      %v1114 = vpop.f32.mrb[0].mxu0
      %v1115 = vadd.f32 %v1010, %v1114
      %v1116 = vpop.f32.mrb[0].mxu0
      %v1117 = vadd.f32 %v1014, %v1116
      %v1118 = vpop.f32.mrb[0].mxu0
      %v1119 = vadd.f32 %v1014, %v1118
      %1120 = vdwg.mxu0
      %v1121 = vtanh.pop %v1083
      %v1122 = vtanh.pop %v1085
      %v1123 = vtanh.pop %v1087
      %v1124 = vtanh.pop %v1089
      %v1125 = vtanh.pop %v1093
      %v1126 = vtanh.pop %v1095
      %v1127 = vtanh.pop %v1097
      %v1128 = vtanh.pop %v1099
      %v1129 = vtanh.pop %v1103
      %v1130 = vtanh.pop %v1105
      %v1131 = vtanh.pop %v1107
      %v1132 = vtanh.pop %v1109
      %v1133 = vtanh.pop %v1113
      %v1134 = vtanh.pop %v1115
      %v1135 = vtanh.pop %v1117
      %v1136 = vtanh.pop %v1119
      %v1137 = vpack.c.bf16 %v1123, %v1121
      %v1138 = vpack.c.bf16 %v1124, %v1122
      %v1139 = vpack.c.bf16 %v1127, %v1125
      %v1140 = vpack.c.bf16 %v1128, %v1126
      %v1141 = vpack.c.bf16 %v1131, %v1129
      %v1142 = vpack.c.bf16 %v1132, %v1130
      %v1143 = vpack.c.bf16 %v1135, %v1133
      %v1144 = vpack.c.bf16 %v1136, %v1134
      %s1145 = scalar_lea.vmem %s3, 96
      %v1146 = vld [vmem:[%s1145] sm:$0xf]
      %v1147 = vld [vmem:[%s1145 + $0x4] sm:$0xf]
      %v1148 = vld [vmem:[%s1145 + $0x8] sm:$0xf]
      %v1149 = vld [vmem:[%s1145 + $0xc] sm:$0xf]
      %v1150 = vld [vmem:[%s1145 + $0x10] sm:$0xf]
      %v1151 = vld [vmem:[%s1145 + $0x14] sm:$0xf]
      %v1152 = vld [vmem:[%s1145 + $0x18] sm:$0xf]
      %v1153 = vld [vmem:[%s1145 + $0x1c] sm:$0xf]
      %1154 = vset.pattern.permute.xlu0 3
      %1155 = vperm.xlu0 %1154, %v627
      %v1156 = vpop.permute.xlu0 %1155
      %1158 = vset.pattern.permute.xlu0 3
      %1159 = vperm.xlu0 %1158, %v628
      %v1160 = vpop.permute.xlu0 %1159
      %1162 = vset.pattern.permute.xlu0 3
      %1163 = vperm.xlu0 %1162, %v629
      %v1164 = vpop.permute.xlu0 %1163
      %1166 = vset.pattern.permute.xlu0 3
      %1167 = vperm.xlu0 %1166, %v630
      %v1168 = vpop.permute.xlu0 %1167
      %1170 = vset.pattern.permute.xlu0 3
      %1171 = vperm.xlu0 %1170, %v631
      %v1172 = vpop.permute.xlu0 %1171
      %1174 = vset.pattern.permute.xlu0 3
      %1175 = vperm.xlu0 %1174, %v632
      %v1176 = vpop.permute.xlu0 %1175
      %1178 = vset.pattern.permute.xlu0 3
      %1179 = vperm.xlu0 %1178, %v633
      %v1180 = vpop.permute.xlu0 %1179
      %1182 = vset.pattern.permute.xlu0 3
      %1183 = vperm.xlu0 %1182, %v634
      %v1184 = vpop.permute.xlu0 %1183
      %v1194 = vunpack.c.l.b16 %v1146
      %v1195 = vunpack.c.l.b16 %v1147
      %v1196 = vunpack.c.l.b16 %v1148
      %v1197 = vunpack.c.l.b16 %v1149
      %v1198 = vunpack.c.l.b16 %v1150
      %v1199 = vunpack.c.l.b16 %v1151
      %v1200 = vunpack.c.l.b16 %v1152
      %v1201 = vunpack.c.l.b16 %v1153
      %v1202 = vpack.c.b16 %v1195, %v1194
      %v1203 = vpack.c.b16 %v1197, %v1196
      %v1204 = vpack.c.b16 %v1199, %v1198
      %v1205 = vpack.c.b16 %v1201, %v1200
      %v1207 = vsel %vm695, %v1202, 0
      %v1210 = vsel %vm695, %v1203, 0
      %v1213 = vsel %vm695, %v1204, 0
      %v1216 = vsel %vm695, %v1205, 0
      %1218 = vmatprep.subr.bf16.mxu0 %v1138
      %1219 = vmatpush1.bf16.msra.mxu0 %v1137
      %1220 = vmatprep.subr.bf16.mxu0 %v1140
      %1221 = vmatpush1.bf16.msra.mxu0 %v1139
      %1222 = vmatprep.subr.bf16.mxu0 %v1142
      %1223 = vmatpush1.bf16.msra.mxu0 %v1141
      %1224 = vmatprep.subr.bf16.mxu0 %v1144
      %1225 = vmatpush1.bf16.msra.mxu0 %v1143
      %1226 = vmatprep.subr.bf16.mxu0 0
      %1227 = vmatpush1.bf16.msra.mxu0 0
      %1228 = vmatprep.subr.bf16.mxu0 0
      %1229 = vmatpush1.bf16.msra.mxu0 0
      %1230 = vmatprep.subr.bf16.mxu0 0
      %1231 = vmatpush1.bf16.msra.mxu0 0
      %1232 = vmatprep.subr.bf16.mxu0 0
      %1233 = vmatpush1.bf16.msra.mxu0 0
      %1234 = vmatprep.subr.bf16.mxu0 0
      %1235 = vmatpush1.bf16.msra.mxu0 0
      %1236 = vmatprep.subr.bf16.mxu0 0
      %1237 = vmatpush1.bf16.msra.mxu0 0
      %1238 = vmatprep.subr.bf16.mxu0 0
      %1239 = vmatpush1.bf16.msra.mxu0 0
      %1240 = vmatprep.subr.bf16.mxu0 0
      %1241 = vmatpush1.bf16.msra.mxu0 0
      %1242 = vmatprep.subr.bf16.mxu0 0
      %1243 = vmatpush1.bf16.msra.mxu0 0
      %1244 = vmatprep.subr.bf16.mxu0 0
      %1245 = vmatpush1.bf16.msra.mxu0 0
      %1246 = vmatprep.subr.bf16.mxu0 0
      %1247 = vmatpush1.bf16.msra.mxu0 0
      %1248 = vmatprep.subr.bf16.mxu0 0
      %1249 = vmatpush1.bf16.msra.mxu0 0
      %1250 = vmatprep.mubr.bf16.mxu0 0
      %1251 = vmatmul.mubr.bf16.gmra.mrb[0].mxu0 %v1207
      %v1252 = vpop.f32.mrb[0].mxu0
      %v1253 = vadd.f32 %v1156, %v1252
      %v1254 = vpop.f32.mrb[0].mxu0
      %v1255 = vadd.f32 %v1156, %v1254
      %v1256 = vpop.f32.mrb[0].mxu0
      %v1257 = vadd.f32 %v1160, %v1256
      %v1258 = vpop.f32.mrb[0].mxu0
      %v1259 = vadd.f32 %v1160, %v1258
      %1260 = vmatprep.mubr.bf16.mxu0 0
      %1261 = vmatmul.mubr.bf16.gmra.mrb[0].mxu0 %v1210
      %v1262 = vpop.f32.mrb[0].mxu0
      %v1263 = vadd.f32 %v1164, %v1262
      %v1264 = vpop.f32.mrb[0].mxu0
      %v1265 = vadd.f32 %v1164, %v1264
      %v1266 = vpop.f32.mrb[0].mxu0
      %v1267 = vadd.f32 %v1168, %v1266
      %v1268 = vpop.f32.mrb[0].mxu0
      %v1269 = vadd.f32 %v1168, %v1268
      %1270 = vmatprep.mubr.bf16.mxu0 0
      %1271 = vmatmul.mubr.bf16.gmra.mrb[0].mxu0 %v1213
      %v1272 = vpop.f32.mrb[0].mxu0
      %v1273 = vadd.f32 %v1172, %v1272
      %v1274 = vpop.f32.mrb[0].mxu0
      %v1275 = vadd.f32 %v1172, %v1274
      %v1276 = vpop.f32.mrb[0].mxu0
      %v1277 = vadd.f32 %v1176, %v1276
      %v1278 = vpop.f32.mrb[0].mxu0
      %v1279 = vadd.f32 %v1176, %v1278
      %1280 = vmatprep.mubr.bf16.mxu0 0
      %1281 = vmatmul.mubr.bf16.gmra.mrb[0].mxu0 %v1216
      %v1282 = vpop.f32.mrb[0].mxu0
      %v1283 = vadd.f32 %v1180, %v1282
      %v1284 = vpop.f32.mrb[0].mxu0
      %v1285 = vadd.f32 %v1180, %v1284
      %v1286 = vpop.f32.mrb[0].mxu0
      %v1287 = vadd.f32 %v1184, %v1286
      %v1288 = vpop.f32.mrb[0].mxu0
      %v1289 = vadd.f32 %v1184, %v1288
      %1290 = vdwg.mxu0
      %v1291 = vtanh.pop %v1253
      %v1292 = vtanh.pop %v1255
      %v1293 = vtanh.pop %v1257
      %v1294 = vtanh.pop %v1259
      %v1295 = vtanh.pop %v1263
      %v1296 = vtanh.pop %v1265
      %v1297 = vtanh.pop %v1267
      %v1298 = vtanh.pop %v1269
      %v1299 = vtanh.pop %v1273
      %v1300 = vtanh.pop %v1275
      %v1301 = vtanh.pop %v1277
      %v1302 = vtanh.pop %v1279
      %v1303 = vtanh.pop %v1283
      %v1304 = vtanh.pop %v1285
      %v1305 = vtanh.pop %v1287
      %v1306 = vtanh.pop %v1289
      %v1307 = vpack.c.bf16 %v1293, %v1291
      %v1308 = vpack.c.bf16 %v1294, %v1292
      %v1309 = vpack.c.bf16 %v1297, %v1295
      %v1310 = vpack.c.bf16 %v1298, %v1296
      %v1311 = vpack.c.bf16 %v1301, %v1299
      %v1312 = vpack.c.bf16 %v1302, %v1300
      %v1313 = vpack.c.bf16 %v1305, %v1303
      %v1314 = vpack.c.bf16 %v1306, %v1304
      %v1315 = vld [vmem:[%s5] sm:$0x1]
      %v1316 = vld [vmem:[%s6] sm:$0x3]
      %1318 = vset.pattern.permute.xlu0 0
      %1319 = vperm.xlu0 %1318, %v1316
      %v1320 = vpop.permute.xlu0 %1319
      %v1323 = vsel %vm695, %v1315, 0
      %1325 = vmatprep.subr.bf16.mxu0 %v1308
      %1326 = vmatpush1.bf16.msra.mxu0 %v1307
      %1327 = vmatprep.subr.bf16.mxu0 %v1310
      %1328 = vmatpush1.bf16.msra.mxu0 %v1309
      %1329 = vmatprep.subr.bf16.mxu0 %v1312
      %1330 = vmatpush1.bf16.msra.mxu0 %v1311
      %1331 = vmatprep.subr.bf16.mxu0 %v1314
      %1332 = vmatpush1.bf16.msra.mxu0 %v1313
      %1333 = vmatprep.subr.bf16.mxu0 0
      %1334 = vmatpush1.bf16.msra.mxu0 0
      %1335 = vmatprep.subr.bf16.mxu0 0
      %1336 = vmatpush1.bf16.msra.mxu0 0
      %1337 = vmatprep.subr.bf16.mxu0 0
      %1338 = vmatpush1.bf16.msra.mxu0 0
      %1339 = vmatprep.subr.bf16.mxu0 0
      %1340 = vmatpush1.bf16.msra.mxu0 0
      %1341 = vmatprep.subr.bf16.mxu0 0
      %1342 = vmatpush1.bf16.msra.mxu0 0
      %1343 = vmatprep.subr.bf16.mxu0 0
      %1344 = vmatpush1.bf16.msra.mxu0 0
      %1345 = vmatprep.subr.bf16.mxu0 0
      %1346 = vmatpush1.bf16.msra.mxu0 0
      %1347 = vmatprep.subr.bf16.mxu0 0
      %1348 = vmatpush1.bf16.msra.mxu0 0
      %1349 = vmatprep.subr.bf16.mxu0 0
      %1350 = vmatpush1.bf16.msra.mxu0 0
      %1351 = vmatprep.subr.bf16.mxu0 0
      %1352 = vmatpush1.bf16.msra.mxu0 0
      %1353 = vmatprep.subr.bf16.mxu0 0
      %1354 = vmatpush1.bf16.msra.mxu0 0
      %1355 = vmatprep.subr.bf16.mxu0 0
      %1356 = vmatpush1.bf16.msra.mxu0 0
      %1357 = vmatprep.mubr.bf16.mxu0 0
      %1358 = vmatmul.mubr.bf16.gmra.mrb[0].mxu0 %v1323
      %v1359 = vpop.f32.mrb[0].mxu0
      %v1360 = vadd.f32 %v1320, %v1359
      %v1361 = vpop.f32.mrb[0].mxu0
      %v1362 = vadd.f32 %v1320, %v1361
      %v1363 = vpop.f32.mrb[0].mxu0
      %v1364 = vpop.f32.mrb[0].mxu0
      %1365 = vdwg.mxu0
      %v1368 = vcombine.low %v1360, %v1362
      %v1370 = vunpack.c.l.s4 1983009808
      %v1371 = vunpack.c.0.s8 %v1370
      %v1372 = vlaneseq
      %v1373 = vshrl.u32 %v1372, 7
      %v1374 = vsub.s32 %v1371, %v1373
      %v1375 = vrot.slane %v1368, %v1374
      %1377 = vst [vmem:[%s280] sm:$0xf] %v1375
      %s1378 = smul.u32 2, %s18
      %p1379 = scmp.lt.s32.totalorder %s1378, 3
      %s1380 = scalar_select %p1379, %s1378, 3
      %s1381 = smul.addr %s1380, 2
      %s1382 = scalar_lea.vmem %s7, %s1381
      // Predicated region
      $region49: #{base_net_forward.1} parent=47 // pred_check
        %p1383 = pneg %p188
      $region50: #{base_net_forward.1} parent=47 // pred_check_branch
        %1385 = sbr.rel (%p1383) target = $region52
      $region51: #{base_net_forward.1} parent=47 // pred_region
        %s1386 = smul.u32 2, %s18
      $region52: #{base_net_forward.1} parent=47 // pred_fallthru
        _
    $region48: #{base_net_forward.1} parent=5 // pred_fallthru
      _
    %p1387 = scmp.le.s32.totalorder 2, %s13
    // Predicated region
    $region53: #{base_net_forward.1} parent=5 // pred_check
      %p1388 = pneg %p1387
    $region54: #{base_net_forward.1} parent=5 // pred_check_branch
      %1390 = sbr.rel (%p1388) target = $region56
    $region55: #{base_net_forward.1} parent=5 // pred_region
      %s1391 = ssub.s32 %s13, 2
      // Predicated region
      $region57: #{base_net_forward.1} parent=55 // pred_check
        %p1392 = pneg %p194
      $region58: #{base_net_forward.1} parent=55 // pred_check_branch
        %1394 = sbr.rel (%p1392) target = $region60
      $region59: #{base_net_forward.1} parent=55 // pred_region
        %s1395 = smul.u32 2, %s19
        %p1396 = scmp.lt.s32.totalorder %s1395, 3
        %s1397 = scalar_select %p1396, %s1395, 3
        %s1398 = smul.addr %s1397, 2
        %s1399 = scalar_lea.vmem %s7, %s1398
      $region60: #{base_net_forward.1} parent=55 // pred_fallthru
        _
    $region56: #{base_net_forward.1} parent=5 // pred_fallthru
      _
  $region6: #{base_net_forward.1} parent=0 // loop_footer
    %s17 = sadd.s32 1, %s13
  $region7: #{base_net_forward.1} parent=0 // loop_footer_branch
    %12 = sbr.rel target = $region3
  $region8: #{base_net_forward.1} parent=0 // loop_exit
    _

</llo_original>
